<compile_context>
chip_gen: v5e
topology: v5e:2x2
jax: 0.10.0
libtpu: 0.0.40
codegen_flags: <defaults>
</compile_context>

<pallas_src>
import functools

import jax
import jax.numpy as jnp
from jax.experimental import pallas as pl
from jax.experimental.pallas import tpu as pltpu


_LANE_QUANTUM = 256   # MXU N-dim on v6e/v7x; also a multiple of v5e's 128.
_BLOCK_B_CAP = 2048   # roofline is flat past ~1024; bigger tiles only add spills.


def _decoder_kernel(zt_ref, w1_ref, b1_ref, w2_ref, b2_ref, w3_ref, b3_ref,
                    out_ref, *, compute_dtype):
    """Fused 3-layer MLP on a [features, block_b] activation slab."""

    def dense(w_ref, x, b_ref):
        # Weights were pre-cast in the wrapper; only the activation needs a cast
        # (no-op on the f32 path). MXU with f32 accumulation, bias add in f32.
        y = jnp.dot(w_ref[...], x.astype(compute_dtype),
                    preferred_element_type=jnp.float32)
        return y + b_ref[...]                      # [out,1] broadcast over lanes

    def lrelu(x):
        # max(x, 0.2*x) == LeakyReLU(0.2) for slope < 1; 2 VPU ops instead of 3.
        return jnp.maximum(x, 0.2 * x)

    x = zt_ref[...]                                # [L, block_b]
    h = lrelu(dense(w1_ref, x, b1_ref))            # [H, block_b]
    h = lrelu(dense(w2_ref, h, b2_ref))            # [H, block_b]
    y = dense(w3_ref, h, b3_ref)                   # [O, block_b]
    out_ref[...] = y.astype(out_ref.dtype)


def _round_up(x, m):
    return (x + m - 1) // m * m


def _choose_block_b(B, block_b=None):
    """Lane-dense batch tile: multiple of 256, capped, >=2 grid steps if possible."""
    if block_b is not None:
        block_b = min(_BLOCK_B_CAP,
                      max(_LANE_QUANTUM, _round_up(block_b, _LANE_QUANTUM)))
    else:
        b_q = _round_up(B, _LANE_QUANTUM)
        if b_q >= 2 * _LANE_QUANTUM:
            # At least 2 grid steps so ("parallel",) feeds both v7x TensorCores.
            block_b = _round_up(pl.cdiv(b_q, 2), _LANE_QUANTUM)
        else:
            block_b = b_q
        block_b = min(block_b, _BLOCK_B_CAP)
    B_pad = _round_up(B, block_b)
    return block_b, B_pad


def _default_compute_dtype():
    # bf16 MXU operands are the fast path on v6e/v7x; keep f32 on v5e/older
    # (no bf16 VPU there and the kernel is overhead-bound anyway).
    try:
        kind = jax.devices()[0].device_kind.lower()
    except Exception:  # pragma: no cover - defensive, e.g. no devices visible
        return jnp.float32
    if "v6" in kind or "v7" in kind:
        return jnp.bfloat16
    return jnp.float32


def decoder_forward(z, params, *, block_b=None, compute_dtype=None):
    """z: [B, latent_dim] float32. params: PyTorch-layout ([out, in]) weights."""
    if compute_dtype is None:
        compute_dtype = _default_compute_dtype()

    w1, b1, w2, b2, w3, b3 = (params["w1"], params["b1"], params["w2"],
                              params["b2"], params["w3"], params["b3"])
    B, L = z.shape
    H = w1.shape[0]
    O = w3.shape[0]

    block_b, B_pad = _choose_block_b(B, block_b)

    # Layout plumbing as one fused expression: pad batch, put it on lanes, cast.
    zt = jnp.pad(z, ((0, B_pad - B), (0, 0))).T.astype(compute_dtype)   # [L, B_pad]
    w1c, w2c, w3c = (w.astype(compute_dtype) for w in (w1, w2, w3))
    b1c, b2c, b3c = (b.astype(jnp.float32) for b in (b1, b2, b3))

    grid = (B_pad // block_b,)

    in_specs = [
        pl.BlockSpec((L, block_b), lambda i: (0, i)),   # z.T tile (batch on lanes)
        pl.BlockSpec((H, L), lambda i: (0, 0)),          # w1  [out, in]
        pl.BlockSpec((H, 1), lambda i: (0, 0)),          # b1
        pl.BlockSpec((H, H), lambda i: (0, 0)),          # w2
        pl.BlockSpec((H, 1), lambda i: (0, 0)),          # b2
        pl.BlockSpec((O, H), lambda i: (0, 0)),          # w3
        pl.BlockSpec((O, 1), lambda i: (0, 0)),          # b3
    ]
    out_specs = pl.BlockSpec((O, block_b), lambda i: (0, i))

    itemsize = jnp.dtype(compute_dtype).itemsize
    cost = pl.CostEstimate(
        flops=2 * B_pad * (L * H + H * H + H * O),
        transcendentals=0,
        bytes_accessed=(B_pad * L * itemsize                  # z.T in
                        + (L * H + H * H + H * O) * itemsize  # weights
                        + (2 * H + O) * 4                     # biases
                        + B_pad * O * 4),                     # out.T
    )

    kernel = functools.partial(_decoder_kernel, compute_dtype=compute_dtype)

    out_t = pl.pallas_call(
        kernel,
        grid=grid,
        in_specs=in_specs,
        out_specs=out_specs,
        out_shape=jax.ShapeDtypeStruct((O, B_pad), jnp.float32),
        compiler_params=pltpu.CompilerParams(
            dimension_semantics=("parallel",)),
        cost_estimate=cost,
    )(zt, w1c, b1c, w2c, b2c, w3c, b3c)

    # Single slice+transpose back to [B, O]; fuses with the surrounding jit.
    return out_t.T[:B]


def init_params(key, latent_dim, hidden_dim, output_dim):
    """Deterministic synthetic init; shapes match the nn.Linear layers ([out, in])."""
    k1, k2, k3, k4, k5, k6 = jax.random.split(key, 6)
    w1 = jax.random.normal(k1, (hidden_dim, latent_dim), jnp.float32) * 0.1
    b1 = jax.random.normal(k2, (hidden_dim, 1), jnp.float32) * 0.1
    w2 = jax.random.normal(k3, (hidden_dim, hidden_dim), jnp.float32) * 0.1
    b2 = jax.random.normal(k4, (hidden_dim, 1), jnp.float32) * 0.1
    w3 = jax.random.normal(k5, (output_dim, hidden_dim), jnp.float32) * 0.1
    b3 = jax.random.normal(k6, (output_dim, 1), jnp.float32) * 0.1
    return dict(w1=w1, b1=b1, w2=w2, b2=b2, w3=w3, b3=b3)


def decoder_reference(z, p):
    """Pure-JAX reference mirroring the PyTorch forward (LeakyReLU slope 0.2)."""
    def lrelu(x):
        return jnp.where(x > 0, x, 0.2 * x)
    h = lrelu(z @ p["w1"].T + p["b1"][:, 0])
    h = lrelu(h @ p["w2"].T + p["b2"][:, 0])
    return h @ p["w3"].T + p["b3"][:, 0]


if __name__ == "__main__":
    # Shapes implied by the module: latent_dim=8, hidden_dim=32, output_dim=16.
    LATENT, HIDDEN, OUT = 8, 32, 16

    key = jax.random.PRNGKey(0)
    kz, kp, kz2 = jax.random.split(key, 3)
    params = init_params(kp, LATENT, HIDDEN, OUT)

    # Jit the whole wrapper so the pad/transpose/cast plumbing and the output
    # slice/transpose compile into one executable around the pallas_call.
    fwd_f32 = jax.jit(functools.partial(decoder_forward, compute_dtype=jnp.float32))
    fwd_bf16 = jax.jit(functools.partial(decoder_forward, compute_dtype=jnp.bfloat16))
    fwd_auto = jax.jit(decoder_forward)   # bf16 on v6e/v7x, f32 on v5e/older

    # Main test: B=512 -> auto block_b=256, grid=(2,) (lane-dense, both v7x TCs).
    B = 512
    z = jax.random.normal(kz, (B, LATENT), jnp.float32)
    x_ref = decoder_reference(z, params)

    x_hat = jax.block_until_ready(fwd_f32(z, params))
    assert x_hat.shape == (B, OUT)
    assert jnp.allclose(x_hat, x_ref, atol=1e-5, rtol=1e-5), "f32 mismatch vs reference"

    # Ragged batch exercising the pad/slice path (pads 100 -> 256, single step).
    B2 = 100
    z2 = jax.random.normal(kz2, (B2, LATENT), jnp.float32)
    x_hat2 = jax.block_until_ready(fwd_f32(z2, params))
    x_ref2 = decoder_reference(z2, params)
    assert x_hat2.shape == (B2, OUT)
    assert jnp.allclose(x_hat2, x_ref2, atol=1e-5, rtol=1e-5), "ragged mismatch"

    # bf16 MXU-operand fast path (v6e/v7x): f32 accumulation + f32 bias/LeakyReLU.
    x_hat_bf16 = jax.block_until_ready(fwd_bf16(z, params))
    assert x_hat_bf16.shape == (B, OUT)
    assert jnp.allclose(x_hat_bf16, x_ref, atol=5e-2, rtol=5e-2), "bf16 mismatch"

    # Auto dtype path (whatever the current generation selects).
    x_hat_auto = jax.block_until_ready(fwd_auto(z, params))
    assert x_hat_auto.shape == (B, OUT)
    assert jnp.allclose(x_hat_auto, x_ref, atol=5e-2, rtol=5e-2), "auto-dtype mismatch"

    print("KERNEL_OK")
</pallas_src>

<mosaic_0001>
module attributes {stable_mosaic.version = 11 : i64} {
  func.func @_decoder_kernel(%arg0: i32, %arg1: memref<8x256xf32, #tpu.memory_space<vmem>>, %arg2: memref<32x8xf32, #tpu.memory_space<vmem>>, %arg3: memref<32x1xf32, #tpu.memory_space<vmem>>, %arg4: memref<32x32xf32, #tpu.memory_space<vmem>>, %arg5: memref<32x1xf32, #tpu.memory_space<vmem>>, %arg6: memref<16x32xf32, #tpu.memory_space<vmem>>, %arg7: memref<16x1xf32, #tpu.memory_space<vmem>>, %arg8: memref<16x256xf32, #tpu.memory_space<vmem>>) attributes {dimension_semantics = [#tpu.dimension_semantics<parallel>], iteration_bounds = array<i64: 2>, scalar_prefetch = 0 : i64, scratch_operands = 0 : i64, tpu.core_type = #tpu.core_type<tc>, window_params = [{transform_indices = @transform_0, window_bounds = array<i64: 8, 256>}, {pipeline_mode = #tpu.pipeline_mode<synchronous>, transform_indices = @transform_1, window_bounds = array<i64: 32, 8>}, {pipeline_mode = #tpu.pipeline_mode<synchronous>, transform_indices = @transform_2, window_bounds = array<i64: 32, 1>}, {pipeline_mode = #tpu.pipeline_mode<synchronous>, transform_indices = @transform_3, window_bounds = array<i64: 32, 32>}, {pipeline_mode = #tpu.pipeline_mode<synchronous>, transform_indices = @transform_4, window_bounds = array<i64: 32, 1>}, {pipeline_mode = #tpu.pipeline_mode<synchronous>, transform_indices = @transform_5, window_bounds = array<i64: 16, 32>}, {pipeline_mode = #tpu.pipeline_mode<synchronous>, transform_indices = @transform_6, window_bounds = array<i64: 16, 1>}, {transform_indices = @transform_7, window_bounds = array<i64: 16, 256>}]} {
    %c0 = arith.constant 0 : index
    %c0_0 = arith.constant 0 : index
    %0 = vector.load %arg1[%c0, %c0_0] : memref<8x256xf32, #tpu.memory_space<vmem>>, vector<8x256xf32>
    %c0_1 = arith.constant 0 : index
    %c0_2 = arith.constant 0 : index
    %1 = vector.load %arg2[%c0_1, %c0_2] : memref<32x8xf32, #tpu.memory_space<vmem>>, vector<32x8xf32>
    %cst = arith.constant dense<0.000000e+00> : vector<32x256xf32>
    %2 = tpu.matmul %1, %0, %cst {dimension_numbers = #tpu.dot_dimension_numbers<[1], [0], [0], [1], [0, 0, 1, 1], [], []>} : vector<32x8xf32>, vector<8x256xf32>, vector<32x256xf32> -> vector<32x256xf32>
    %c0_3 = arith.constant 0 : index
    %c0_4 = arith.constant 0 : index
    %3 = vector.load %arg3[%c0_3, %c0_4] : memref<32x1xf32, #tpu.memory_space<vmem>>, vector<32x1xf32>
    %4 = vector.broadcast %3 : vector<32x1xf32> to vector<32x256xf32>
    %5 = arith.addf %2, %4 : vector<32x256xf32>
    %cst_5 = arith.constant 2.000000e-01 : f32
    %6 = vector.broadcast %cst_5 : f32 to vector<32x256xf32>
    %7 = arith.mulf %6, %5 : vector<32x256xf32>
    %8 = arith.maximumf %5, %7 : vector<32x256xf32>
    %c0_6 = arith.constant 0 : index
    %c0_7 = arith.constant 0 : index
    %9 = vector.load %arg4[%c0_6, %c0_7] : memref<32x32xf32, #tpu.memory_space<vmem>>, vector<32x32xf32>
    %cst_8 = arith.constant dense<0.000000e+00> : vector<32x256xf32>
    %10 = tpu.matmul %9, %8, %cst_8 {dimension_numbers = #tpu.dot_dimension_numbers<[1], [0], [0], [1], [0, 0, 1, 1], [], []>} : vector<32x32xf32>, vector<32x256xf32>, vector<32x256xf32> -> vector<32x256xf32>
    %c0_9 = arith.constant 0 : index
    %c0_10 = arith.constant 0 : index
    %11 = vector.load %arg5[%c0_9, %c0_10] : memref<32x1xf32, #tpu.memory_space<vmem>>, vector<32x1xf32>
    %12 = vector.broadcast %11 : vector<32x1xf32> to vector<32x256xf32>
    %13 = arith.addf %10, %12 : vector<32x256xf32>
    %cst_11 = arith.constant 2.000000e-01 : f32
    %14 = vector.broadcast %cst_11 : f32 to vector<32x256xf32>
    %15 = arith.mulf %14, %13 : vector<32x256xf32>
    %16 = arith.maximumf %13, %15 : vector<32x256xf32>
    %c0_12 = arith.constant 0 : index
    %c0_13 = arith.constant 0 : index
    %17 = vector.load %arg6[%c0_12, %c0_13] : memref<16x32xf32, #tpu.memory_space<vmem>>, vector<16x32xf32>
    %cst_14 = arith.constant dense<0.000000e+00> : vector<16x256xf32>
    %18 = tpu.matmul %17, %16, %cst_14 {dimension_numbers = #tpu.dot_dimension_numbers<[1], [0], [0], [1], [0, 0, 1, 1], [], []>} : vector<16x32xf32>, vector<32x256xf32>, vector<16x256xf32> -> vector<16x256xf32>
    %c0_15 = arith.constant 0 : index
    %c0_16 = arith.constant 0 : index
    %19 = vector.load %arg7[%c0_15, %c0_16] : memref<16x1xf32, #tpu.memory_space<vmem>>, vector<16x1xf32>
    %20 = vector.broadcast %19 : vector<16x1xf32> to vector<16x256xf32>
    %21 = arith.addf %18, %20 : vector<16x256xf32>
    %c0_17 = arith.constant 0 : index
    %c0_18 = arith.constant 0 : index
    %22 = vector.load %arg8[%c0_17, %c0_18] : memref<16x256xf32, #tpu.memory_space<vmem>>, vector<16x256xf32>
    tpu.vector_store %arg8[%c0_17, %c0_18], %21 {strides = array<i32>} : memref<16x256xf32, #tpu.memory_space<vmem>>, vector<16x256xf32>,
    return
  }
  func.func @transform_0(%arg0: i32) -> (i32, i32) {
    %c0_i32 = arith.constant 0 : i32
    %c0_i32_0 = arith.constant 0 : i32
    return %c0_i32, %arg0 : i32, i32
  }
  func.func @transform_1(%arg0: i32) -> (i32, i32) {
    %c0_i32 = arith.constant 0 : i32
    %c0_i32_0 = arith.constant 0 : i32
    %c0_i32_1 = arith.constant 0 : i32
    return %c0_i32, %c0_i32_0 : i32, i32
  }
  func.func @transform_2(%arg0: i32) -> (i32, i32) {
    %c0_i32 = arith.constant 0 : i32
    %c0_i32_0 = arith.constant 0 : i32
    %c0_i32_1 = arith.constant 0 : i32
    return %c0_i32, %c0_i32_0 : i32, i32
  }
  func.func @transform_3(%arg0: i32) -> (i32, i32) {
    %c0_i32 = arith.constant 0 : i32
    %c0_i32_0 = arith.constant 0 : i32
    %c0_i32_1 = arith.constant 0 : i32
    return %c0_i32, %c0_i32_0 : i32, i32
  }
  func.func @transform_4(%arg0: i32) -> (i32, i32) {
    %c0_i32 = arith.constant 0 : i32
    %c0_i32_0 = arith.constant 0 : i32
    %c0_i32_1 = arith.constant 0 : i32
    return %c0_i32, %c0_i32_0 : i32, i32
  }
  func.func @transform_5(%arg0: i32) -> (i32, i32) {
    %c0_i32 = arith.constant 0 : i32
    %c0_i32_0 = arith.constant 0 : i32
    %c0_i32_1 = arith.constant 0 : i32
    return %c0_i32, %c0_i32_0 : i32, i32
  }
  func.func @transform_6(%arg0: i32) -> (i32, i32) {
    %c0_i32 = arith.constant 0 : i32
    %c0_i32_0 = arith.constant 0 : i32
    %c0_i32_1 = arith.constant 0 : i32
    return %c0_i32, %c0_i32_0 : i32, i32
  }
  func.func @transform_7(%arg0: i32) -> (i32, i32) {
    %c0_i32 = arith.constant 0 : i32
    %c0_i32_0 = arith.constant 0 : i32
    return %c0_i32, %arg0 : i32, i32
  }
}

</mosaic_0001>

<llo_original>
// kernel: decoder_forward.1
$region0: #{decoder_forward.1}
  #allocation0 [shape = 'u32[]', space=smem, size = 0x4, offset = 0x4, fixed_abs, tag = 'smem constant byte address 0x4 - core index']
  #allocation1 [shape = 'u32[72,128]{1,0:T(1,128)}', space=vmem, size = 0x9000, scoped, tag = 'internal scratch']
  %s0 = inlined_call_operand.vmem [shape: f32[8,512], index: 0, kind: input, shape index: {}]
  %s1 = inlined_call_operand.vmem [shape: f32[32,8], index: 1, kind: input, shape index: {}]
  %s2 = inlined_call_operand.vmem [shape: f32[32,1], index: 2, kind: input, shape index: {}]
  %s3 = inlined_call_operand.vmem [shape: f32[32,32], index: 3, kind: input, shape index: {}]
  %s4 = inlined_call_operand.vmem [shape: f32[32,1], index: 4, kind: input, shape index: {}]
  %s5 = inlined_call_operand.vmem [shape: f32[16,32], index: 5, kind: input, shape index: {}]
  %s6 = inlined_call_operand.vmem [shape: f32[16,1], index: 6, kind: input, shape index: {}]
  %s7 = inlined_call_operand.hbm [shape: f32[16,512], index: 7, kind: output, shape index: {}]
  %s8 = sld [smem:[#allocation0]]
  $region61: #{decoder_forward.1} parent=0
    _
  %s10 = ssub.s32 1, %s8
  %s11 = scalar_select 0, %s10, %s8
  $region1: #{decoder_forward.1} parent=0
    #allocation2 [shape = 'u8[32768]{0}', space=vmem, size = 0x8000, scoped, tag = 'output window, operand 0']
    #allocation3 [shape = 's32[2]{0}', space=sflag, size = 0x8, scoped, tag = 'scoped memory for decoder_forward.1']
    %12 = vsyncpa [#allocation3], 0
    %s13 = scalar_lea.sflag [#allocation3], 1
    %14 = vsyncpa %s13, 0
    loop: start=0, step=1, limit=4
    $region2: #{decoder_forward.1} parent=1 // loop_pre_header
      _
    $region3: #{decoder_forward.1} parent=1 // loop_header
      %s16 = sphi 0, %s20
      %p17 = scmp.ge.s32.totalorder %s16, 4
      %s26 = sphi 0, %s28
      %s29 = sphi 0, %s26
      %s30 = sphi 0, %s29
      %s46 = sphi 0, %s30
      %s50 = sphi 0, %s50
      %s52 = sphi 0, %s50
      %s53 = sphi 0, %s52
      %s67 = sphi 0, %s53
      %s71 = sphi 0, %s71
      %s73 = sphi 0, %s71
      %s74 = sphi 0, %s73
      %s88 = sphi 0, %s74
      %s92 = sphi 0, %s92
      %s94 = sphi 0, %s92
      %s95 = sphi 0, %s94
      %s109 = sphi 0, %s95
      %s113 = sphi 0, %s113
      %s115 = sphi 0, %s113
      %s116 = sphi 0, %s115
      %s130 = sphi 0, %s116
      %s134 = sphi 0, %s134
      %s136 = sphi 0, %s134
      %s137 = sphi 0, %s136
      %s151 = sphi 0, %s137
      %s155 = sphi 0, %s155
      %s157 = sphi 0, %s155
      %s158 = sphi 0, %s157
      %s172 = sphi 0, %s158
      %s178 = sphi 0, %s180
      %s181 = sphi 0, %s178
      %s182 = sphi 0, %s181
      %s198 = sphi 0, %s182
    $region4: #{decoder_forward.1} parent=1 // loop_header_branch
      %19 = sbr.rel (%p17) target = $region8
    $region5: #{decoder_forward.1} parent=1 // loop_body
      %s21 = ssub.s32 %s16, 1
      %s22 = ssub.s32 %s16, 2
      %s23 = sadd.s32 %s16, 1
      %s24 = ssub.s32 %s16, %s23
      %p25 = scmp.eq.s32.totalorder %s24, 0
      %s27 = sadd.s32 %s26, 1
      %s28 = scalar_select %p25, %s26, %s27
      %p31 = pneg %p25
      %p32 = scmp.eq.s32.totalorder %s16, 1
      %p33 = por %p31, %p32
      %p34 = scmp.ne.s32.totalorder %s26, %s29
      %p35 = scmp.eq.s32.totalorder %s16, 0
      %p36 = por %p34, %p35
      %p37 = scmp.ne.s32.totalorder %s26, %s29
      %p38 = scmp.eq.s32.totalorder %s21, 1
      %p39 = por %p37, %p38
      %p40 = scmp.ne.s32.totalorder %s29, %s30
      %p41 = scmp.eq.s32.totalorder %s21, 0
      %p42 = por %p40, %p41
      %p43 = scmp.ne.s32.totalorder %s29, %s30
      %p44 = scmp.eq.s32.totalorder %s22, 1
      %p45 = por %p43, %p44
      %p47 = scmp.ne.s32.totalorder %s30, %s46
      %p48 = scmp.eq.s32.totalorder %s22, 0
      %p49 = por %p47, %p48
      %s51 = sadd.s32 %s50, 1
      %p54 = scmp.eq.s32.totalorder %s16, 1
      %p55 = scmp.ne.s32.totalorder %s50, %s52
      %p56 = scmp.eq.s32.totalorder %s16, 0
      %p57 = por %p55, %p56
      %p58 = scmp.ne.s32.totalorder %s50, %s52
      %p59 = scmp.eq.s32.totalorder %s21, 1
      %p60 = por %p58, %p59
      %p61 = scmp.ne.s32.totalorder %s52, %s53
      %p62 = scmp.eq.s32.totalorder %s21, 0
      %p63 = por %p61, %p62
      %p64 = scmp.ne.s32.totalorder %s52, %s53
      %p65 = scmp.eq.s32.totalorder %s22, 1
      %p66 = por %p64, %p65
      %p68 = scmp.ne.s32.totalorder %s53, %s67
      %p69 = scmp.eq.s32.totalorder %s22, 0
      %p70 = por %p68, %p69
      %s72 = sadd.s32 %s71, 1
      %p75 = scmp.eq.s32.totalorder %s16, 1
      %p76 = scmp.ne.s32.totalorder %s71, %s73
      %p77 = scmp.eq.s32.totalorder %s16, 0
      %p78 = por %p76, %p77
      %p79 = scmp.ne.s32.totalorder %s71, %s73
      %p80 = scmp.eq.s32.totalorder %s21, 1
      %p81 = por %p79, %p80
      %p82 = scmp.ne.s32.totalorder %s73, %s74
      %p83 = scmp.eq.s32.totalorder %s21, 0
      %p84 = por %p82, %p83
      %p85 = scmp.ne.s32.totalorder %s73, %s74
      %p86 = scmp.eq.s32.totalorder %s22, 1
      %p87 = por %p85, %p86
      %p89 = scmp.ne.s32.totalorder %s74, %s88
      %p90 = scmp.eq.s32.totalorder %s22, 0
      %p91 = por %p89, %p90
      %s93 = sadd.s32 %s92, 1
      %p96 = scmp.eq.s32.totalorder %s16, 1
      %p97 = scmp.ne.s32.totalorder %s92, %s94
      %p98 = scmp.eq.s32.totalorder %s16, 0
      %p99 = por %p97, %p98
      %p100 = scmp.ne.s32.totalorder %s92, %s94
      %p101 = scmp.eq.s32.totalorder %s21, 1
      %p102 = por %p100, %p101
      %p103 = scmp.ne.s32.totalorder %s94, %s95
      %p104 = scmp.eq.s32.totalorder %s21, 0
      %p105 = por %p103, %p104
      %p106 = scmp.ne.s32.totalorder %s94, %s95
      %p107 = scmp.eq.s32.totalorder %s22, 1
      %p108 = por %p106, %p107
      %p110 = scmp.ne.s32.totalorder %s95, %s109
      %p111 = scmp.eq.s32.totalorder %s22, 0
      %p112 = por %p110, %p111
      %s114 = sadd.s32 %s113, 1
      %p117 = scmp.eq.s32.totalorder %s16, 1
      %p118 = scmp.ne.s32.totalorder %s113, %s115
      %p119 = scmp.eq.s32.totalorder %s16, 0
      %p120 = por %p118, %p119
      %p121 = scmp.ne.s32.totalorder %s113, %s115
      %p122 = scmp.eq.s32.totalorder %s21, 1
      %p123 = por %p121, %p122
      %p124 = scmp.ne.s32.totalorder %s115, %s116
      %p125 = scmp.eq.s32.totalorder %s21, 0
      %p126 = por %p124, %p125
      %p127 = scmp.ne.s32.totalorder %s115, %s116
      %p128 = scmp.eq.s32.totalorder %s22, 1
      %p129 = por %p127, %p128
      %p131 = scmp.ne.s32.totalorder %s116, %s130
      %p132 = scmp.eq.s32.totalorder %s22, 0
      %p133 = por %p131, %p132
      %s135 = sadd.s32 %s134, 1
      %p138 = scmp.eq.s32.totalorder %s16, 1
      %p139 = scmp.ne.s32.totalorder %s134, %s136
      %p140 = scmp.eq.s32.totalorder %s16, 0
      %p141 = por %p139, %p140
      %p142 = scmp.ne.s32.totalorder %s134, %s136
      %p143 = scmp.eq.s32.totalorder %s21, 1
      %p144 = por %p142, %p143
      %p145 = scmp.ne.s32.totalorder %s136, %s137
      %p146 = scmp.eq.s32.totalorder %s21, 0
      %p147 = por %p145, %p146
      %p148 = scmp.ne.s32.totalorder %s136, %s137
      %p149 = scmp.eq.s32.totalorder %s22, 1
      %p150 = por %p148, %p149
      %p152 = scmp.ne.s32.totalorder %s137, %s151
      %p153 = scmp.eq.s32.totalorder %s22, 0
      %p154 = por %p152, %p153
      %s156 = sadd.s32 %s155, 1
      %p159 = scmp.eq.s32.totalorder %s16, 1
      %p160 = scmp.ne.s32.totalorder %s155, %s157
      %p161 = scmp.eq.s32.totalorder %s16, 0
      %p162 = por %p160, %p161
      %p163 = scmp.ne.s32.totalorder %s155, %s157
      %p164 = scmp.eq.s32.totalorder %s21, 1
      %p165 = por %p163, %p164
      %p166 = scmp.ne.s32.totalorder %s157, %s158
      %p167 = scmp.eq.s32.totalorder %s21, 0
      %p168 = por %p166, %p167
      %p169 = scmp.ne.s32.totalorder %s157, %s158
      %p170 = scmp.eq.s32.totalorder %s22, 1
      %p171 = por %p169, %p170
      %p173 = scmp.ne.s32.totalorder %s158, %s172
      %p174 = scmp.eq.s32.totalorder %s22, 0
      %p175 = por %p173, %p174
      %s176 = ssub.s32 %s16, %s23
      %p177 = scmp.eq.s32.totalorder %s176, 0
      %s179 = sadd.s32 %s178, 1
      %s180 = scalar_select %p177, %s178, %s179
      %p183 = pneg %p177
      %p184 = scmp.eq.s32.totalorder %s16, 1
      %p185 = por %p183, %p184
      %p186 = scmp.ne.s32.totalorder %s178, %s181
      %p187 = scmp.eq.s32.totalorder %s16, 0
      %p188 = por %p186, %p187
      %p189 = scmp.ne.s32.totalorder %s178, %s181
      %p190 = scmp.eq.s32.totalorder %s21, 1
      %p191 = por %p189, %p190
      %p192 = scmp.ne.s32.totalorder %s181, %s182
      %p193 = scmp.eq.s32.totalorder %s21, 0
      %p194 = por %p192, %p193
      %p195 = scmp.ne.s32.totalorder %s181, %s182
      %p196 = scmp.eq.s32.totalorder %s22, 1
      %p197 = por %p195, %p196
      %p199 = scmp.ne.s32.totalorder %s182, %s198
      %p200 = scmp.eq.s32.totalorder %s22, 0
      %p201 = por %p199, %p200
      %p202 = scmp.le.s32.totalorder 1, %s16
      %p203 = scmp.lt.s32.totalorder %s16, 3
      %p204 = pnand %p202, %p203
      %p205 = pneg %p204
      // Predicated region
      $region9: #{decoder_forward.1} parent=5 // pred_check
        _
      $region10: #{decoder_forward.1} parent=5 // pred_check_branch
        %207 = sbr.rel (%p204) target = $region12
      $region11: #{decoder_forward.1} parent=5 // pred_region
        %s208 = ssub.s32 %s16, 1
        // Predicated region
        $region13: #{decoder_forward.1} parent=11 // pred_check
          %p209 = pneg %p63
        $region14: #{decoder_forward.1} parent=11 // pred_check_branch
          %211 = sbr.rel (%p209) target = $region16
        $region15: #{decoder_forward.1} parent=11 // pred_region
          _
        $region16: #{decoder_forward.1} parent=11 // pred_fallthru
          _
        // Predicated region
        $region17: #{decoder_forward.1} parent=11 // pred_check
          %p212 = pneg %p84
        $region18: #{decoder_forward.1} parent=11 // pred_check_branch
          %214 = sbr.rel (%p212) target = $region20
        $region19: #{decoder_forward.1} parent=11 // pred_region
          _
        $region20: #{decoder_forward.1} parent=11 // pred_fallthru
          _
        // Predicated region
        $region21: #{decoder_forward.1} parent=11 // pred_check
          %p215 = pneg %p105
        $region22: #{decoder_forward.1} parent=11 // pred_check_branch
          %217 = sbr.rel (%p215) target = $region24
        $region23: #{decoder_forward.1} parent=11 // pred_region
          _
        $region24: #{decoder_forward.1} parent=11 // pred_fallthru
          _
        // Predicated region
        $region25: #{decoder_forward.1} parent=11 // pred_check
          %p218 = pneg %p126
        $region26: #{decoder_forward.1} parent=11 // pred_check_branch
          %220 = sbr.rel (%p218) target = $region28
        $region27: #{decoder_forward.1} parent=11 // pred_region
          _
        $region28: #{decoder_forward.1} parent=11 // pred_fallthru
          _
        // Predicated region
        $region29: #{decoder_forward.1} parent=11 // pred_check
          %p221 = pneg %p147
        $region30: #{decoder_forward.1} parent=11 // pred_check_branch
          %223 = sbr.rel (%p221) target = $region32
        $region31: #{decoder_forward.1} parent=11 // pred_region
          _
        $region32: #{decoder_forward.1} parent=11 // pred_fallthru
          _
        // Predicated region
        $region33: #{decoder_forward.1} parent=11 // pred_check
          %p224 = pneg %p168
        $region34: #{decoder_forward.1} parent=11 // pred_check_branch
          %226 = sbr.rel (%p224) target = $region36
        $region35: #{decoder_forward.1} parent=11 // pred_region
          _
        $region36: #{decoder_forward.1} parent=11 // pred_fallthru
          _
      $region12: #{decoder_forward.1} parent=5 // pred_fallthru
        _
      %p227 = scmp.lt.s32.totalorder %s16, 2
      // Predicated region
      $region37: #{decoder_forward.1} parent=5 // pred_check
        %p228 = pneg %p227
      $region38: #{decoder_forward.1} parent=5 // pred_check_branch
        %230 = sbr.rel (%p228) target = $region40
      $region39: #{decoder_forward.1} parent=5 // pred_region
        // Predicated region
        $region41: #{decoder_forward.1} parent=39 // pred_check
          %p231 = pneg %p36
        $region42: #{decoder_forward.1} parent=39 // pred_check_branch
          %233 = sbr.rel (%p231) target = $region44
        $region43: #{decoder_forward.1} parent=39 // pred_region
          %s234 = smul.u32 2, %s16
          %p235 = scmp.lt.s32.totalorder %s234, 3
          %s236 = scalar_select %p235, %s234, 3
          %s237 = smul.addr %s236, 8
          %s238 = scalar_lea.vmem %s0, %s237
          %s239 = smul.u32 2, %s16
        $region44: #{decoder_forward.1} parent=39 // pred_fallthru
          _
      $region40: #{decoder_forward.1} parent=5 // pred_fallthru
        _
      %p240 = scmp.le.s32.totalorder 1, %s16
      %p241 = scmp.lt.s32.totalorder %s16, 3
      %p242 = pnand %p240, %p241
      %p243 = pneg %p242
      // Predicated region
      $region45: #{decoder_forward.1} parent=5 // pred_check
        _
      $region46: #{decoder_forward.1} parent=5 // pred_check_branch
        %245 = sbr.rel (%p242) target = $region48
      $region47: #{decoder_forward.1} parent=5 // pred_region
        %s246 = ssub.s32 %s16, 1
        %s247 = smul.u32 2, %s21
        %p248 = scmp.lt.s32.totalorder %s247, 3
        %s249 = scalar_select %p248, %s247, 3
        %s250 = smul.addr %s249, 8
        %s251 = scalar_lea.vmem %s0, %s250
        %p252 = pneg %p42
        %p253 = pneg %p39
        %p254 = pneg %p63
        %p255 = pneg %p60
        %p256 = pneg %p84
        %p257 = pneg %p81
        %p258 = pneg %p105
        %p259 = pneg %p102
        %p260 = pneg %p126
        %p261 = pneg %p123
        %p262 = pneg %p147
        %p263 = pneg %p144
        %p264 = pneg %p168
        %p265 = pneg %p165
        %p266 = pneg %p194
        %p267 = pneg %p191
        %s268 = sand.u32 %s181, 1
        %s269 = scalar_lea.sflag [#allocation3], %s268
        %s270 = sand.u32 %s181, 1
        %s271 = smul.addr %s270, 32
        %s272 = scalar_lea.vmem [#allocation2], %s271
        %s273 = smul.u32 2, %s21
        %p274 = scmp.lt.s32.totalorder %s273, 3
        %s275 = scalar_select %p274, %s273, 3
        %s276 = smul.addr %s275, 8
        %s277 = scalar_lea.vmem %s0, %s276
        %s278 = smul.u32 2, %s21
        %s279 = smul.u32 2, %s21
        %v280 = vld [vmem:[%s277] sm:$0xff]
        %v281 = vld [vmem:[%s277 + $0x8] sm:$0xff]
        %v282 = vld [vmem:[%s1] sm:$0xff]
        %v283 = vld [vmem:[%s1 + $0x8] sm:$0xff]
        %v284 = vld [vmem:[%s1 + $0x10] sm:$0xff]
        %v285 = vld [vmem:[%s1 + $0x18] sm:$0xff]
        %v286 = vld [vmem:[%s2] sm:$0xff]
        %v287 = vld [vmem:[%s2 + $0x8] sm:$0xff]
        %v288 = vld [vmem:[%s2 + $0x10] sm:$0xff]
        %v289 = vld [vmem:[%s2 + $0x18] sm:$0xff]
        %291 = vset.pattern.permute.xlu0 0
        %292 = vperm.xlu0 %291, %v286
        %v293 = vpop.permute.xlu0 %292
        %296 = vset.pattern.permute.xlu0 0
        %297 = vperm.xlu0 %296, %v287
        %v298 = vpop.permute.xlu0 %297
        %301 = vset.pattern.permute.xlu0 0
        %302 = vperm.xlu0 %301, %v288
        %v303 = vpop.permute.xlu0 %302
        %306 = vset.pattern.permute.xlu0 0
        %307 = vperm.xlu0 %306, %v289
        %v308 = vpop.permute.xlu0 %307
        %vm310 = vcmask 64512
        %v312 = vsel %vm310, %v282, 0
        %v315 = vsel %vm310, %v283, 0
        %v318 = vsel %vm310, %v284, 0
        %v321 = vsel %vm310, %v285, 0
        %323 = vmatpush.msra.mxu0 0.0
        %324 = vmatpush.msra.mxu0 0.0
        %325 = vmatpush.msra.mxu0 0.0
        %326 = vmatpush.msra.mxu0 0.0
        %327 = vmatpush.msra.mxu0 0.0
        %328 = vmatpush.msra.mxu0 0.0
        %329 = vmatpush.msra.mxu0 0.0
        %330 = vmatpush.msra.mxu0 0.0
        %331 = vmatpush.msra.mxu0 0.0
        %332 = vmatpush.msra.mxu0 0.0
        %333 = vmatpush.msra.mxu0 0.0
        %334 = vmatpush.msra.mxu0 0.0
        %335 = vmatpush.msra.mxu0 0.0
        %336 = vmatpush.msra.mxu0 0.0
        %337 = vmatpush.msra.mxu0 0.0
        %338 = vmatpush.msra.mxu0 %v280
        %339 = vmatmul.f32.gmra.mxu0 %v312
        %v340 = vpop.f32.mrf.mxu0
        %v341 = vadd.f32 %v293, %v340
        %342 = vmatmul.f32.gmra.mxu0 %v315
        %v343 = vpop.f32.mrf.mxu0
        %v344 = vadd.f32 %v298, %v343
        %345 = vmatmul.f32.gmra.mxu0 %v318
        %v346 = vpop.f32.mrf.mxu0
        %v347 = vadd.f32 %v303, %v346
        %348 = vmatmul.f32.gmra.mxu0 %v321
        %v349 = vpop.f32.mrf.mxu0
        %v350 = vadd.f32 %v308, %v349
        %351 = vdwg.mxu0
        %352 = vmatpush.msra.mxu0 0.0
        %353 = vmatpush.msra.mxu0 0.0
        %354 = vmatpush.msra.mxu0 0.0
        %355 = vmatpush.msra.mxu0 0.0
        %356 = vmatpush.msra.mxu0 0.0
        %357 = vmatpush.msra.mxu0 0.0
        %358 = vmatpush.msra.mxu0 0.0
        %359 = vmatpush.msra.mxu0 0.0
        %360 = vmatpush.msra.mxu0 0.0
        %361 = vmatpush.msra.mxu0 0.0
        %362 = vmatpush.msra.mxu0 0.0
        %363 = vmatpush.msra.mxu0 0.0
        %364 = vmatpush.msra.mxu0 0.0
        %365 = vmatpush.msra.mxu0 0.0
        %366 = vmatpush.msra.mxu0 0.0
        %367 = vmatpush.msra.mxu0 %v281
        %368 = vmatmul.f32.gmra.mxu0 %v312
        %v369 = vpop.f32.mrf.mxu0
        %v370 = vadd.f32 %v293, %v369
        %371 = vmatmul.f32.gmra.mxu0 %v315
        %v372 = vpop.f32.mrf.mxu0
        %v373 = vadd.f32 %v298, %v372
        %374 = vmatmul.f32.gmra.mxu0 %v318
        %v375 = vpop.f32.mrf.mxu0
        %v376 = vadd.f32 %v303, %v375
        %377 = vmatmul.f32.gmra.mxu0 %v321
        %v378 = vpop.f32.mrf.mxu0
        %v379 = vadd.f32 %v308, %v378
        %380 = vdwg.mxu0
        %v381 = vmul.f32 %v341, 0.2
        %v382 = vmul.f32 %v370, 0.2
        %v383 = vmul.f32 %v344, 0.2
        %v384 = vmul.f32 %v373, 0.2
        %v385 = vmul.f32 %v347, 0.2
        %v386 = vmul.f32 %v376, 0.2
        %v387 = vmul.f32 %v350, 0.2
        %v388 = vmul.f32 %v379, 0.2
        %v389 = vmax.f32 %v341, %v381
        %v390 = vmax.f32 %v370, %v382
        %v391 = vmax.f32 %v344, %v383
        %v392 = vmax.f32 %v373, %v384
        %v393 = vmax.f32 %v347, %v385
        %v394 = vmax.f32 %v376, %v386
        %v395 = vmax.f32 %v350, %v387
        %v396 = vmax.f32 %v379, %v388
        %v397 = vld [vmem:[%s3] sm:$0xff]
        %v398 = vld [vmem:[%s3 + $0x8] sm:$0xff]
        %v399 = vld [vmem:[%s3 + $0x10] sm:$0xff]
        %v400 = vld [vmem:[%s3 + $0x18] sm:$0xff]
        %v401 = vld [vmem:[%s4] sm:$0xff]
        %v402 = vld [vmem:[%s4 + $0x8] sm:$0xff]
        %v403 = vld [vmem:[%s4 + $0x10] sm:$0xff]
        %v404 = vld [vmem:[%s4 + $0x18] sm:$0xff]
        %406 = vset.pattern.permute.xlu0 0
        %407 = vperm.xlu0 %406, %v401
        %v408 = vpop.permute.xlu0 %407
        %411 = vset.pattern.permute.xlu0 0
        %412 = vperm.xlu0 %411, %v402
        %v413 = vpop.permute.xlu0 %412
        %416 = vset.pattern.permute.xlu0 0
        %417 = vperm.xlu0 %416, %v403
        %v418 = vpop.permute.xlu0 %417
        %421 = vset.pattern.permute.xlu0 0
        %422 = vperm.xlu0 %421, %v404
        %v423 = vpop.permute.xlu0 %422
        %vm425 = vcmask 261120
        %v427 = vsel %vm425, %v397, 0
        %v430 = vsel %vm425, %v398, 0
        %v433 = vsel %vm425, %v399, 0
        %v436 = vsel %vm425, %v400, 0
        %438 = vmatpush.msra.mxu0 0.0
        %439 = vmatpush.msra.mxu0 0.0
        %440 = vmatpush.msra.mxu0 0.0
        %441 = vmatpush.msra.mxu0 0.0
        %442 = vmatpush.msra.mxu0 0.0
        %443 = vmatpush.msra.mxu0 0.0
        %444 = vmatpush.msra.mxu0 0.0
        %445 = vmatpush.msra.mxu0 0.0
        %446 = vmatpush.msra.mxu0 0.0
        %447 = vmatpush.msra.mxu0 0.0
        %448 = vmatpush.msra.mxu0 0.0
        %449 = vmatpush.msra.mxu0 0.0
        %450 = vmatpush.msra.mxu0 %v395
        %451 = vmatpush.msra.mxu0 %v393
        %452 = vmatpush.msra.mxu0 %v391
        %453 = vmatpush.msra.mxu0 %v389
        %454 = vmatmul.f32.gmra.mxu0 %v427
        %v455 = vpop.f32.mrf.mxu0
        %v456 = vadd.f32 %v408, %v455
        %457 = vmatmul.f32.gmra.mxu0 %v430
        %v458 = vpop.f32.mrf.mxu0
        %v459 = vadd.f32 %v413, %v458
        %460 = vmatmul.f32.gmra.mxu0 %v433
        %v461 = vpop.f32.mrf.mxu0
        %v462 = vadd.f32 %v418, %v461
        %463 = vmatmul.f32.gmra.mxu0 %v436
        %v464 = vpop.f32.mrf.mxu0
        %v465 = vadd.f32 %v423, %v464
        %466 = vdwg.mxu0
        %467 = vmatpush.msra.mxu0 0.0
        %468 = vmatpush.msra.mxu0 0.0
        %469 = vmatpush.msra.mxu0 0.0
        %470 = vmatpush.msra.mxu0 0.0
        %471 = vmatpush.msra.mxu0 0.0
        %472 = vmatpush.msra.mxu0 0.0
        %473 = vmatpush.msra.mxu0 0.0
        %474 = vmatpush.msra.mxu0 0.0
        %475 = vmatpush.msra.mxu0 0.0
        %476 = vmatpush.msra.mxu0 0.0
        %477 = vmatpush.msra.mxu0 0.0
        %478 = vmatpush.msra.mxu0 0.0
        %479 = vmatpush.msra.mxu0 %v396
        %480 = vmatpush.msra.mxu0 %v394
        %481 = vmatpush.msra.mxu0 %v392
        %482 = vmatpush.msra.mxu0 %v390
        %483 = vmatmul.f32.gmra.mxu0 %v427
        %v484 = vpop.f32.mrf.mxu0
        %v485 = vadd.f32 %v408, %v484
        %486 = vmatmul.f32.gmra.mxu0 %v430
        %v487 = vpop.f32.mrf.mxu0
        %v488 = vadd.f32 %v413, %v487
        %489 = vmatmul.f32.gmra.mxu0 %v433
        %v490 = vpop.f32.mrf.mxu0
        %v491 = vadd.f32 %v418, %v490
        %492 = vmatmul.f32.gmra.mxu0 %v436
        %v493 = vpop.f32.mrf.mxu0
        %v494 = vadd.f32 %v423, %v493
        %495 = vdwg.mxu0
        %v496 = vmul.f32 %v456, 0.2
        %v497 = vmul.f32 %v485, 0.2
        %v498 = vmul.f32 %v459, 0.2
        %v499 = vmul.f32 %v488, 0.2
        %v500 = vmul.f32 %v462, 0.2
        %v501 = vmul.f32 %v491, 0.2
        %v502 = vmul.f32 %v465, 0.2
        %v503 = vmul.f32 %v494, 0.2
        %v504 = vmax.f32 %v456, %v496
        %v505 = vmax.f32 %v485, %v497
        %v506 = vmax.f32 %v459, %v498
        %v507 = vmax.f32 %v488, %v499
        %v508 = vmax.f32 %v462, %v500
        %v509 = vmax.f32 %v491, %v501
        %v510 = vmax.f32 %v465, %v502
        %v511 = vmax.f32 %v494, %v503
        %v512 = vld [vmem:[%s5] sm:$0xff]
        %v513 = vld [vmem:[%s5 + $0x8] sm:$0xff]
        %v514 = vld [vmem:[%s6] sm:$0xff]
        %v515 = vld [vmem:[%s6 + $0x8] sm:$0xff]
        %517 = vset.pattern.permute.xlu0 0
        %518 = vperm.xlu0 %517, %v514
        %v519 = vpop.permute.xlu0 %518
        %522 = vset.pattern.permute.xlu0 0
        %523 = vperm.xlu0 %522, %v515
        %v524 = vpop.permute.xlu0 %523
        %v527 = vsel %vm425, %v512, 0
        %v530 = vsel %vm425, %v513, 0
        %532 = vmatpush.msra.mxu0 0.0
        %533 = vmatpush.msra.mxu0 0.0
        %534 = vmatpush.msra.mxu0 0.0
        %535 = vmatpush.msra.mxu0 0.0
        %536 = vmatpush.msra.mxu0 0.0
        %537 = vmatpush.msra.mxu0 0.0
        %538 = vmatpush.msra.mxu0 0.0
        %539 = vmatpush.msra.mxu0 0.0
        %540 = vmatpush.msra.mxu0 0.0
        %541 = vmatpush.msra.mxu0 0.0
        %542 = vmatpush.msra.mxu0 0.0
        %543 = vmatpush.msra.mxu0 0.0
        %544 = vmatpush.msra.mxu0 %v510
        %545 = vmatpush.msra.mxu0 %v508
        %546 = vmatpush.msra.mxu0 %v506
        %547 = vmatpush.msra.mxu0 %v504
        %548 = vmatmul.f32.gmra.mxu0 %v527
        %v549 = vpop.f32.mrf.mxu0
        %v550 = vadd.f32 %v519, %v549
        %551 = vmatmul.f32.gmra.mxu0 %v530
        %v552 = vpop.f32.mrf.mxu0
        %v553 = vadd.f32 %v524, %v552
        %554 = vdwg.mxu0
        %555 = vmatpush.msra.mxu0 0.0
        %556 = vmatpush.msra.mxu0 0.0
        %557 = vmatpush.msra.mxu0 0.0
        %558 = vmatpush.msra.mxu0 0.0
        %559 = vmatpush.msra.mxu0 0.0
        %560 = vmatpush.msra.mxu0 0.0
        %561 = vmatpush.msra.mxu0 0.0
        %562 = vmatpush.msra.mxu0 0.0
        %563 = vmatpush.msra.mxu0 0.0
        %564 = vmatpush.msra.mxu0 0.0
        %565 = vmatpush.msra.mxu0 0.0
        %566 = vmatpush.msra.mxu0 0.0
        %567 = vmatpush.msra.mxu0 %v511
        %568 = vmatpush.msra.mxu0 %v509
        %569 = vmatpush.msra.mxu0 %v507
        %570 = vmatpush.msra.mxu0 %v505
        %571 = vmatmul.f32.gmra.mxu0 %v527
        %v572 = vpop.f32.mrf.mxu0
        %v573 = vadd.f32 %v519, %v572
        %574 = vmatmul.f32.gmra.mxu0 %v530
        %v575 = vpop.f32.mrf.mxu0
        %v576 = vadd.f32 %v524, %v575
        %577 = vdwg.mxu0
        %578 = vst [vmem:[%s272] sm:$0xff] %v550
        %579 = vst [vmem:[%s272 + $0x8] sm:$0xff] %v573
        %580 = vst [vmem:[%s272 + $0x10] sm:$0xff] %v553
        %581 = vst [vmem:[%s272 + $0x18] sm:$0xff] %v576
        %s582 = sand.u32 %s181, 1
        %s583 = scalar_lea.sflag [#allocation3], %s582
        %s584 = sand.u32 %s181, 1
        %s585 = smul.addr %s584, 32
        %s586 = scalar_lea.vmem [#allocation2], %s585
        // Predicated region
        $region49: #{decoder_forward.1} parent=47 // pred_check
          %p587 = pneg %p191
        $region50: #{decoder_forward.1} parent=47 // pred_check_branch
          %589 = sbr.rel (%p587) target = $region52
        $region51: #{decoder_forward.1} parent=47 // pred_region
          %s590 = smul.u32 2, %s21
          %592 = vsyncadd %s583, 0
          %s593 = smul.addr %s590, 8
          %s594 = scalar_lea.hbm %s7, %s593
          %s595 = sshll.u32 %s586, 4
          %s596 = int_to_ptr.vmem [resolvable:$true] %s595
          %s597 = sshll.u32 %s594, 4
          %s598 = int_to_ptr.hbm [resolvable:$true] %s597
          %603 = dma.vmem_to_hbm [thread:$0]  %s596, 512, %s598, %s583, 256, 512, 16
        $region52: #{decoder_forward.1} parent=47 // pred_fallthru
          _
      $region48: #{decoder_forward.1} parent=5 // pred_fallthru
        _
      %p604 = scmp.le.s32.totalorder 2, %s16
      // Predicated region
      $region53: #{decoder_forward.1} parent=5 // pred_check
        %p605 = pneg %p604
      $region54: #{decoder_forward.1} parent=5 // pred_check_branch
        %607 = sbr.rel (%p605) target = $region56
      $region55: #{decoder_forward.1} parent=5 // pred_region
        %s608 = ssub.s32 %s16, 2
        // Predicated region
        $region57: #{decoder_forward.1} parent=55 // pred_check
          %p609 = pneg %p197
        $region58: #{decoder_forward.1} parent=55 // pred_check_branch
          %611 = sbr.rel (%p609) target = $region60
        $region59: #{decoder_forward.1} parent=55 // pred_region
          %s612 = sand.u32 %s182, 1
          %s613 = scalar_lea.sflag [#allocation3], %s612
          %s614 = sand.u32 %s182, 1
          %s615 = smul.addr %s614, 32
          %s616 = scalar_lea.vmem [#allocation2], %s615
          %618 = dma.done %s613, 512
        $region60: #{decoder_forward.1} parent=55 // pred_fallthru
          _
      $region56: #{decoder_forward.1} parent=5 // pred_fallthru
        _
    $region6: #{decoder_forward.1} parent=1 // loop_footer
      %s20 = sadd.s32 1, %s16
    $region7: #{decoder_forward.1} parent=1 // loop_footer_branch
      %15 = sbr.rel target = $region3
    $region8: #{decoder_forward.1} parent=1 // loop_exit
      _
    %619 = vsyncpa [#allocation3], 1
    %s620 = scalar_lea.sflag [#allocation3], 1
    %621 = vsyncpa %s620, 1

</llo_original>
